<compile_context>
chip_gen: v6e
topology: v6e:2x2x1
jax: 0.10.0
libtpu: 0.0.40
codegen_flags: <defaults>
</compile_context>

<pallas_src>
import functools

import jax
import jax.numpy as jnp
from jax import lax
from jax.experimental import pallas as pl
from jax.experimental.pallas import tpu as pltpu


def inverted_residual_kernel(
    x_ref,      # [1, Cin, HW]   channels on sublanes, flattened spatial on lanes
    w1_ref,     # [Cexp, Cin]    1x1 expand weights
    wdw_ref,    # [Cexp, 9]      3x3 depthwise taps, column t = ky*3 + kx
    w3_ref,     # [Cout, Cexp]   1x1 project weights
    pe_ref,     # [Cexp, 4]      packed folded BN params, columns [s1, b1, s2, b2]
    po_ref,     # [Cout, 2]      packed folded BN params, columns [s3, b3]
    m_ref,      # [9, HW]        0/1 boundary (zero-padding) masks per tap
    o_ref,      # [1, Cout, HW]  lane-dense output block
    *, H, W, use_res,
):
    HW = H * W
    x = x_ref[0]                                                      # (Cin, HW)

    # ---- stage 1: 1x1 expand conv + BN + ReLU (MXU, lane-dense result) ----
    e = jnp.dot(w1_ref[...], x, preferred_element_type=jnp.float32)   # (Cexp, HW)
    e = jnp.maximum(e * pe_ref[:, 0:1] + pe_ref[:, 1:2], 0.0)

    # ---- stage 2: 3x3 depthwise conv (stride 1) + BN + ReLU ----
    # Tap (dy, dx) of the zero-padded map == lane roll of the flattened map by
    # -(dy*W + dx) with out-of-range positions masked to zero.  Rolls run on
    # the otherwise-idle XLU slot; masks/weights are VPU broadcasts.
    acc = None
    for t in range(9):
        dy, dx = t // 3 - 1, t % 3 - 1
        shift = (-(dy * W + dx)) % HW
        tap = pltpu.roll(e, shift, axis=1) if shift else e
        if dy != 0 or dx != 0:
            tap = tap * m_ref[t:t + 1, :]          # (1, HW) boundary mask
        term = tap * wdw_ref[:, t:t + 1]           # (Cexp, 1) per-channel tap
        acc = term if acc is None else acc + term
    d = jnp.maximum(acc * pe_ref[:, 2:3] + pe_ref[:, 3:4], 0.0)       # (Cexp, HW)

    # ---- stage 3: 1x1 project conv + BN (no ReLU) ----
    out = jnp.dot(w3_ref[...], d, preferred_element_type=jnp.float32)  # (Cout, HW)
    out = out * po_ref[:, 0:1] + po_ref[:, 1:2]

    # ---- optional residual (stride == 1 and Cin == Cout) ----
    if use_res:
        out = out + x

    # Lane-dense store: last dim HW is a large multiple of 128, no reshape.
    o_ref[0] = out.astype(o_ref.dtype)


def inverted_residual(x_nchw, w1_t, s1, b1, wdw_t, s2, b2, w3_t, s3, b3,
                      stride, use_res_connect):
    """NCHW in / NCHW out, matching the PyTorch module (eval-mode BN)."""
    N, Cin, H, W = x_nchw.shape
    Cexp = w1_t.shape[0]
    Cout = w3_t.shape[0]
    HW = H * W
    assert stride in (1, 2)
    if use_res_connect:
        assert stride == 1 and Cin == Cout

    # NCHW -> (N, C, H*W): free reshape, spatial lands on the 128-lane axis.
    x = x_nchw.reshape(N, Cin, HW)

    # PyTorch conv weights -> matmul / tap layouts (no transposes needed).
    w1m = w1_t[:, :, 0, 0]                         # (Cexp, Cin)
    wdw = wdw_t[:, 0, :, :].reshape(Cexp, 9)       # (Cexp, 9), col t = ky*3+kx
    w3m = w3_t[:, :, 0, 0]                         # (Cout, Cexp)

    # Consolidate the six per-channel BN vectors into two packed operands.
    pe = jnp.stack([s1, b1, s2, b2], axis=1).astype(jnp.float32)   # (Cexp, 4)
    po = jnp.stack([s3, b3], axis=1).astype(jnp.float32)           # (Cout, 2)

    # Precompute the 9 boundary masks (zero padding) for the roll-based taps.
    hh, ww = jnp.meshgrid(jnp.arange(H), jnp.arange(W), indexing="ij")
    hh = hh.reshape(HW)
    ww = ww.reshape(HW)
    mask_rows = []
    for t in range(9):
        dy, dx = t // 3 - 1, t % 3 - 1
        valid = ((hh + dy >= 0) & (hh + dy < H) &
                 (ww + dx >= 0) & (ww + dx < W))
        mask_rows.append(valid.astype(jnp.float32))
    masks = jnp.stack(mask_rows, axis=0)                           # (9, HW)

    kernel = functools.partial(
        inverted_residual_kernel, H=H, W=W, use_res=use_res_connect)

    out_flat = pl.pallas_call(
        kernel,
        out_shape=jax.ShapeDtypeStruct((N, Cout, HW), x.dtype),
        grid_spec=pltpu.PrefetchScalarGridSpec(
            num_scalar_prefetch=0,
            grid=(N,),
            in_specs=[
                pl.BlockSpec((1, Cin, HW), lambda b: (b, 0, 0)),
                pl.BlockSpec((Cexp, Cin), lambda b: (0, 0)),
                pl.BlockSpec((Cexp, 9), lambda b: (0, 0)),
                pl.BlockSpec((Cout, Cexp), lambda b: (0, 0)),
                pl.BlockSpec((Cexp, 4), lambda b: (0, 0)),
                pl.BlockSpec((Cout, 2), lambda b: (0, 0)),
                pl.BlockSpec((9, HW), lambda b: (0, 0)),
            ],
            out_specs=pl.BlockSpec((1, Cout, HW), lambda b: (b, 0, 0)),
        ),
        compiler_params=pltpu.CompilerParams(
            dimension_semantics=("parallel",)),
    )(x, w1m, wdw, w3m, pe, po, masks)

    out = out_flat.reshape(N, Cout, H, W)          # free reshape (no transpose)
    if stride == 2:
        # stride-2 conv == stride-1 conv subsampled at even positions
        # (pointwise project + BN commute with subsampling).
        out = out[:, :, ::2, ::2]
    return out


def reference_nchw(x, w1_t, s1, b1, wdw_t, s2, b2, w3_t, s3, b3,
                   stride, use_res_connect):
    """Pure-JAX reference (NCHW) mirroring the PyTorch forward."""
    dn = ("NCHW", "OIHW", "NCHW")
    Cexp = w1_t.shape[0]

    def bn(y, s, b):
        return y * s.reshape(1, -1, 1, 1) + b.reshape(1, -1, 1, 1)

    e = lax.conv_general_dilated(x, w1_t, (1, 1), [(0, 0), (0, 0)],
                                 dimension_numbers=dn)
    e = jnp.maximum(bn(e, s1, b1), 0.0)
    d = lax.conv_general_dilated(e, wdw_t, (stride, stride), [(1, 1), (1, 1)],
                                 dimension_numbers=dn, feature_group_count=Cexp)
    d = jnp.maximum(bn(d, s2, b2), 0.0)
    o = lax.conv_general_dilated(d, w3_t, (1, 1), [(0, 0), (0, 0)],
                                 dimension_numbers=dn)
    o = bn(o, s3, b3)
    return x + o if use_res_connect else o


if __name__ == "__main__":
    # Shapes consistent with the module: inp=4, expand_ratio=6, NCHW=[2,4,16,16].
    N, Cin, H, W = 2, 4, 16, 16
    expand_ratio = 6
    Cexp = Cin * expand_ratio

    key = jax.random.PRNGKey(0)
    ks = jax.random.split(key, 10)

    x = jax.random.normal(ks[0], (N, Cin, H, W), jnp.float32)

    # Conv weights in PyTorch layouts (bias=False in the module).
    w1_t = jax.random.normal(ks[1], (Cexp, Cin, 1, 1), jnp.float32) * 0.1
    wdw_t = jax.random.normal(ks[2], (Cexp, 1, 3, 3), jnp.float32) * 0.1

    def bn_params(k, C):
        k1, k2, k3, k4 = jax.random.split(k, 4)
        gamma = jax.random.uniform(k1, (C,), jnp.float32, 0.5, 1.5)
        beta = jax.random.normal(k2, (C,), jnp.float32) * 0.1
        mean = jax.random.normal(k3, (C,), jnp.float32) * 0.1
        var = jax.random.uniform(k4, (C,), jnp.float32, 0.5, 1.5)
        eps = 1e-5
        scale = gamma / jnp.sqrt(var + eps)
        bias = beta - mean * scale
        return scale, bias

    s1, b1 = bn_params(ks[4], Cexp)
    s2, b2 = bn_params(ks[5], Cexp)

    # Case 1: stride=1, use_res_connect=True, oup == inp.
    Cout1 = Cin
    w3_a = jax.random.normal(ks[3], (Cout1, Cexp, 1, 1), jnp.float32) * 0.1
    s3a, b3a = bn_params(ks[6], Cout1)
    out1 = inverted_residual(x, w1_t, s1, b1, wdw_t, s2, b2, w3_a, s3a, b3a,
                             stride=1, use_res_connect=True)
    out1 = jax.block_until_ready(out1)
    ref1 = reference_nchw(x, w1_t, s1, b1, wdw_t, s2, b2, w3_a, s3a, b3a,
                          stride=1, use_res_connect=True)
    assert out1.shape == ref1.shape == (N, Cout1, H, W)
    assert jnp.allclose(out1, ref1, atol=1e-3, rtol=1e-3), \
        f"stride=1 max abs err {jnp.max(jnp.abs(out1 - ref1))}"

    # Case 2: stride=2, use_res_connect=False, oup != inp.
    Cout2 = 8
    w3_b = jax.random.normal(ks[7], (Cout2, Cexp, 1, 1), jnp.float32) * 0.1
    s3b, b3b = bn_params(ks[8], Cout2)
    out2 = inverted_residual(x, w1_t, s1, b1, wdw_t, s2, b2, w3_b, s3b, b3b,
                             stride=2, use_res_connect=False)
    out2 = jax.block_until_ready(out2)
    ref2 = reference_nchw(x, w1_t, s1, b1, wdw_t, s2, b2, w3_b, s3b, b3b,
                          stride=2, use_res_connect=False)
    assert out2.shape == ref2.shape == (N, Cout2, H // 2, W // 2)
    assert jnp.allclose(out2, ref2, atol=1e-3, rtol=1e-3), \
        f"stride=2 max abs err {jnp.max(jnp.abs(out2 - ref2))}"

    print("KERNEL_OK")
</pallas_src>

<mosaic_0001>
module attributes {stable_mosaic.version = 11 : i64} {
  func.func @inverted_residual_kernel(%arg0: i32, %arg1: memref<1x4x256xf32, #tpu.memory_space<vmem>>, %arg2: memref<24x4xf32, #tpu.memory_space<vmem>>, %arg3: memref<24x9xf32, #tpu.memory_space<vmem>>, %arg4: memref<4x24xf32, #tpu.memory_space<vmem>>, %arg5: memref<24x4xf32, #tpu.memory_space<vmem>>, %arg6: memref<4x2xf32, #tpu.memory_space<vmem>>, %arg7: memref<9x256xf32, #tpu.memory_space<vmem>>, %arg8: memref<1x4x256xf32, #tpu.memory_space<vmem>>) attributes {dimension_semantics = [#tpu.dimension_semantics<parallel>], iteration_bounds = array<i64: 2>, scalar_prefetch = 0 : i64, scratch_operands = 0 : i64, tpu.core_type = #tpu.core_type<tc>, window_params = [{transform_indices = @transform_0, window_bounds = array<i64: 1, 4, 256>}, {pipeline_mode = #tpu.pipeline_mode<synchronous>, transform_indices = @transform_1, window_bounds = array<i64: 24, 4>}, {pipeline_mode = #tpu.pipeline_mode<synchronous>, transform_indices = @transform_2, window_bounds = array<i64: 24, 9>}, {pipeline_mode = #tpu.pipeline_mode<synchronous>, transform_indices = @transform_3, window_bounds = array<i64: 4, 24>}, {pipeline_mode = #tpu.pipeline_mode<synchronous>, transform_indices = @transform_4, window_bounds = array<i64: 24, 4>}, {pipeline_mode = #tpu.pipeline_mode<synchronous>, transform_indices = @transform_5, window_bounds = array<i64: 4, 2>}, {pipeline_mode = #tpu.pipeline_mode<synchronous>, transform_indices = @transform_6, window_bounds = array<i64: 9, 256>}, {transform_indices = @transform_7, window_bounds = array<i64: 1, 4, 256>}]} {
    %c0 = arith.constant 0 : index
    %c0_0 = arith.constant 0 : index
    %c0_1 = arith.constant 0 : index
    %0 = vector.load %arg1[%c0, %c0_0, %c0_1] : memref<1x4x256xf32, #tpu.memory_space<vmem>>, vector<1x4x256xf32>
    %1 = vector.shape_cast %0 : vector<1x4x256xf32> to vector<4x256xf32>
    %c0_2 = arith.constant 0 : index
    %c0_3 = arith.constant 0 : index
    %2 = vector.load %arg2[%c0_2, %c0_3] : memref<24x4xf32, #tpu.memory_space<vmem>>, vector<24x4xf32>
    %cst = arith.constant dense<0.000000e+00> : vector<24x256xf32>
    %3 = tpu.matmul %2, %1, %cst {dimension_numbers = #tpu.dot_dimension_numbers<[1], [0], [0], [1], [0, 0, 1, 1], [], []>} : vector<24x4xf32>, vector<4x256xf32>, vector<24x256xf32> -> vector<24x256xf32>
    %c0_4 = arith.constant 0 : index
    %c0_5 = arith.constant 0 : index
    %4 = vector.load %arg5[%c0_4, %c0_5] : memref<24x4xf32, #tpu.memory_space<vmem>>, vector<24x1xf32>
    %5 = vector.broadcast %4 : vector<24x1xf32> to vector<24x256xf32>
    %6 = arith.mulf %3, %5 : vector<24x256xf32>
    %c0_6 = arith.constant 0 : index
    %c1 = arith.constant 1 : index
    %7 = vector.load %arg5[%c0_6, %c1] : memref<24x4xf32, #tpu.memory_space<vmem>>, vector<24x1xf32>
    %8 = vector.broadcast %7 : vector<24x1xf32> to vector<24x256xf32>
    %9 = arith.addf %6, %8 : vector<24x256xf32>
    %cst_7 = arith.constant 0.000000e+00 : f32
    %10 = vector.broadcast %cst_7 : f32 to vector<24x256xf32>
    %11 = arith.maximumf %9, %10 : vector<24x256xf32>
    %c17_i32 = arith.constant 17 : i32
    %12 = tpu.dynamic_rotate %11 by %c17_i32 dim 1 : vector<24x256xf32>, i32 -> vector<24x256xf32>
    %c0_8 = arith.constant 0 : index
    %c0_9 = arith.constant 0 : index
    %13 = vector.load %arg7[%c0_8, %c0_9] : memref<9x256xf32, #tpu.memory_space<vmem>>, vector<1x256xf32>
    %14 = vector.broadcast %13 : vector<1x256xf32> to vector<24x256xf32>
    %15 = arith.mulf %12, %14 : vector<24x256xf32>
    %c0_10 = arith.constant 0 : index
    %c0_11 = arith.constant 0 : index
    %16 = vector.load %arg3[%c0_10, %c0_11] : memref<24x9xf32, #tpu.memory_space<vmem>>, vector<24x1xf32>
    %17 = vector.broadcast %16 : vector<24x1xf32> to vector<24x256xf32>
    %18 = arith.mulf %15, %17 : vector<24x256xf32>
    %c16_i32 = arith.constant 16 : i32
    %19 = tpu.dynamic_rotate %11 by %c16_i32 dim 1 : vector<24x256xf32>, i32 -> vector<24x256xf32>
    %c1_12 = arith.constant 1 : index
    %c0_13 = arith.constant 0 : index
    %20 = vector.load %arg7[%c1_12, %c0_13] : memref<9x256xf32, #tpu.memory_space<vmem>>, vector<1x256xf32>
    %21 = vector.broadcast %20 : vector<1x256xf32> to vector<24x256xf32>
    %22 = arith.mulf %19, %21 : vector<24x256xf32>
    %c0_14 = arith.constant 0 : index
    %c1_15 = arith.constant 1 : index
    %23 = vector.load %arg3[%c0_14, %c1_15] : memref<24x9xf32, #tpu.memory_space<vmem>>, vector<24x1xf32>
    %24 = vector.broadcast %23 : vector<24x1xf32> to vector<24x256xf32>
    %25 = arith.mulf %22, %24 : vector<24x256xf32>
    %26 = arith.addf %18, %25 : vector<24x256xf32>
    %c15_i32 = arith.constant 15 : i32
    %27 = tpu.dynamic_rotate %11 by %c15_i32 dim 1 : vector<24x256xf32>, i32 -> vector<24x256xf32>
    %c2 = arith.constant 2 : index
    %c0_16 = arith.constant 0 : index
    %28 = vector.load %arg7[%c2, %c0_16] : memref<9x256xf32, #tpu.memory_space<vmem>>, vector<1x256xf32>
    %29 = vector.broadcast %28 : vector<1x256xf32> to vector<24x256xf32>
    %30 = arith.mulf %27, %29 : vector<24x256xf32>
    %c0_17 = arith.constant 0 : index
    %c2_18 = arith.constant 2 : index
    %31 = vector.load %arg3[%c0_17, %c2_18] : memref<24x9xf32, #tpu.memory_space<vmem>>, vector<24x1xf32>
    %32 = vector.broadcast %31 : vector<24x1xf32> to vector<24x256xf32>
    %33 = arith.mulf %30, %32 : vector<24x256xf32>
    %34 = arith.addf %26, %33 : vector<24x256xf32>
    %c1_i32 = arith.constant 1 : i32
    %35 = tpu.dynamic_rotate %11 by %c1_i32 dim 1 : vector<24x256xf32>, i32 -> vector<24x256xf32>
    %c3 = arith.constant 3 : index
    %c0_19 = arith.constant 0 : index
    %36 = vector.load %arg7[%c3, %c0_19] : memref<9x256xf32, #tpu.memory_space<vmem>>, vector<1x256xf32>
    %37 = vector.broadcast %36 : vector<1x256xf32> to vector<24x256xf32>
    %38 = arith.mulf %35, %37 : vector<24x256xf32>
    %c0_20 = arith.constant 0 : index
    %c3_21 = arith.constant 3 : index
    %39 = vector.load %arg3[%c0_20, %c3_21] : memref<24x9xf32, #tpu.memory_space<vmem>>, vector<24x1xf32>
    %40 = vector.broadcast %39 : vector<24x1xf32> to vector<24x256xf32>
    %41 = arith.mulf %38, %40 : vector<24x256xf32>
    %42 = arith.addf %34, %41 : vector<24x256xf32>
    %c0_22 = arith.constant 0 : index
    %c4 = arith.constant 4 : index
    %43 = vector.load %arg3[%c0_22, %c4] : memref<24x9xf32, #tpu.memory_space<vmem>>, vector<24x1xf32>
    %44 = vector.broadcast %43 : vector<24x1xf32> to vector<24x256xf32>
    %45 = arith.mulf %11, %44 : vector<24x256xf32>
    %46 = arith.addf %42, %45 : vector<24x256xf32>
    %c255_i32 = arith.constant 255 : i32
    %47 = tpu.dynamic_rotate %11 by %c255_i32 dim 1 : vector<24x256xf32>, i32 -> vector<24x256xf32>
    %c5 = arith.constant 5 : index
    %c0_23 = arith.constant 0 : index
    %48 = vector.load %arg7[%c5, %c0_23] : memref<9x256xf32, #tpu.memory_space<vmem>>, vector<1x256xf32>
    %49 = vector.broadcast %48 : vector<1x256xf32> to vector<24x256xf32>
    %50 = arith.mulf %47, %49 : vector<24x256xf32>
    %c0_24 = arith.constant 0 : index
    %c5_25 = arith.constant 5 : index
    %51 = vector.load %arg3[%c0_24, %c5_25] : memref<24x9xf32, #tpu.memory_space<vmem>>, vector<24x1xf32>
    %52 = vector.broadcast %51 : vector<24x1xf32> to vector<24x256xf32>
    %53 = arith.mulf %50, %52 : vector<24x256xf32>
    %54 = arith.addf %46, %53 : vector<24x256xf32>
    %c241_i32 = arith.constant 241 : i32
    %55 = tpu.dynamic_rotate %11 by %c241_i32 dim 1 : vector<24x256xf32>, i32 -> vector<24x256xf32>
    %c6 = arith.constant 6 : index
    %c0_26 = arith.constant 0 : index
    %56 = vector.load %arg7[%c6, %c0_26] : memref<9x256xf32, #tpu.memory_space<vmem>>, vector<1x256xf32>
    %57 = vector.broadcast %56 : vector<1x256xf32> to vector<24x256xf32>
    %58 = arith.mulf %55, %57 : vector<24x256xf32>
    %c0_27 = arith.constant 0 : index
    %c6_28 = arith.constant 6 : index
    %59 = vector.load %arg3[%c0_27, %c6_28] : memref<24x9xf32, #tpu.memory_space<vmem>>, vector<24x1xf32>
    %60 = vector.broadcast %59 : vector<24x1xf32> to vector<24x256xf32>
    %61 = arith.mulf %58, %60 : vector<24x256xf32>
    %62 = arith.addf %54, %61 : vector<24x256xf32>
    %c240_i32 = arith.constant 240 : i32
    %63 = tpu.dynamic_rotate %11 by %c240_i32 dim 1 : vector<24x256xf32>, i32 -> vector<24x256xf32>
    %c7 = arith.constant 7 : index
    %c0_29 = arith.constant 0 : index
    %64 = vector.load %arg7[%c7, %c0_29] : memref<9x256xf32, #tpu.memory_space<vmem>>, vector<1x256xf32>
    %65 = vector.broadcast %64 : vector<1x256xf32> to vector<24x256xf32>
    %66 = arith.mulf %63, %65 : vector<24x256xf32>
    %c0_30 = arith.constant 0 : index
    %c7_31 = arith.constant 7 : index
    %67 = vector.load %arg3[%c0_30, %c7_31] : memref<24x9xf32, #tpu.memory_space<vmem>>, vector<24x1xf32>
    %68 = vector.broadcast %67 : vector<24x1xf32> to vector<24x256xf32>
    %69 = arith.mulf %66, %68 : vector<24x256xf32>
    %70 = arith.addf %62, %69 : vector<24x256xf32>
    %c239_i32 = arith.constant 239 : i32
    %71 = tpu.dynamic_rotate %11 by %c239_i32 dim 1 : vector<24x256xf32>, i32 -> vector<24x256xf32>
    %c8 = arith.constant 8 : index
    %c0_32 = arith.constant 0 : index
    %72 = vector.load %arg7[%c8, %c0_32] : memref<9x256xf32, #tpu.memory_space<vmem>>, vector<1x256xf32>
    %73 = vector.broadcast %72 : vector<1x256xf32> to vector<24x256xf32>
    %74 = arith.mulf %71, %73 : vector<24x256xf32>
    %c0_33 = arith.constant 0 : index
    %c8_34 = arith.constant 8 : index
    %75 = vector.load %arg3[%c0_33, %c8_34] : memref<24x9xf32, #tpu.memory_space<vmem>>, vector<24x1xf32>
    %76 = vector.broadcast %75 : vector<24x1xf32> to vector<24x256xf32>
    %77 = arith.mulf %74, %76 : vector<24x256xf32>
    %78 = arith.addf %70, %77 : vector<24x256xf32>
    %c0_35 = arith.constant 0 : index
    %c2_36 = arith.constant 2 : index
    %79 = vector.load %arg5[%c0_35, %c2_36] : memref<24x4xf32, #tpu.memory_space<vmem>>, vector<24x1xf32>
    %80 = vector.broadcast %79 : vector<24x1xf32> to vector<24x256xf32>
    %81 = arith.mulf %78, %80 : vector<24x256xf32>
    %c0_37 = arith.constant 0 : index
    %c3_38 = arith.constant 3 : index
    %82 = vector.load %arg5[%c0_37, %c3_38] : memref<24x4xf32, #tpu.memory_space<vmem>>, vector<24x1xf32>
    %83 = vector.broadcast %82 : vector<24x1xf32> to vector<24x256xf32>
    %84 = arith.addf %81, %83 : vector<24x256xf32>
    %cst_39 = arith.constant 0.000000e+00 : f32
    %85 = vector.broadcast %cst_39 : f32 to vector<24x256xf32>
    %86 = arith.maximumf %84, %85 : vector<24x256xf32>
    %c0_40 = arith.constant 0 : index
    %c0_41 = arith.constant 0 : index
    %87 = vector.load %arg4[%c0_40, %c0_41] : memref<4x24xf32, #tpu.memory_space<vmem>>, vector<4x24xf32>
    %cst_42 = arith.constant dense<0.000000e+00> : vector<4x256xf32>
    %88 = tpu.matmul %87, %86, %cst_42 {dimension_numbers = #tpu.dot_dimension_numbers<[1], [0], [0], [1], [0, 0, 1, 1], [], []>} : vector<4x24xf32>, vector<24x256xf32>, vector<4x256xf32> -> vector<4x256xf32>
    %c0_43 = arith.constant 0 : index
    %c0_44 = arith.constant 0 : index
    %89 = vector.load %arg6[%c0_43, %c0_44] : memref<4x2xf32, #tpu.memory_space<vmem>>, vector<4x1xf32>
    %90 = vector.broadcast %89 : vector<4x1xf32> to vector<4x256xf32>
    %91 = arith.mulf %88, %90 : vector<4x256xf32>
    %c0_45 = arith.constant 0 : index
    %c1_46 = arith.constant 1 : index
    %92 = vector.load %arg6[%c0_45, %c1_46] : memref<4x2xf32, #tpu.memory_space<vmem>>, vector<4x1xf32>
    %93 = vector.broadcast %92 : vector<4x1xf32> to vector<4x256xf32>
    %94 = arith.addf %91, %93 : vector<4x256xf32>
    %95 = arith.addf %94, %1 : vector<4x256xf32>
    %c0_47 = arith.constant 0 : index
    %c0_48 = arith.constant 0 : index
    %c0_49 = arith.constant 0 : index
    %96 = vector.load %arg8[%c0_47, %c0_48, %c0_49] : memref<1x4x256xf32, #tpu.memory_space<vmem>>, vector<1x4x256xf32>
    %97 = vector.shape_cast %96 : vector<1x4x256xf32> to vector<4x256xf32>
    %98 = vector.shape_cast %95 : vector<4x256xf32> to vector<1x4x256xf32>
    tpu.vector_store %arg8[%c0_47, %c0_48, %c0_49], %98 {strides = array<i32>} : memref<1x4x256xf32, #tpu.memory_space<vmem>>, vector<1x4x256xf32>,
    return
  }
  func.func @transform_0(%arg0: i32) -> (i32, i32, i32) {
    %c0_i32 = arith.constant 0 : i32
    %c0_i32_0 = arith.constant 0 : i32
    %c0_i32_1 = arith.constant 0 : i32
    return %arg0, %c0_i32, %c0_i32_0 : i32, i32, i32
  }
  func.func @transform_1(%arg0: i32) -> (i32, i32) {
    %c0_i32 = arith.constant 0 : i32
    %c0_i32_0 = arith.constant 0 : i32
    %c0_i32_1 = arith.constant 0 : i32
    return %c0_i32, %c0_i32_0 : i32, i32
  }
  func.func @transform_2(%arg0: i32) -> (i32, i32) {
    %c0_i32 = arith.constant 0 : i32
    %c0_i32_0 = arith.constant 0 : i32
    %c0_i32_1 = arith.constant 0 : i32
    return %c0_i32, %c0_i32_0 : i32, i32
  }
  func.func @transform_3(%arg0: i32) -> (i32, i32) {
    %c0_i32 = arith.constant 0 : i32
    %c0_i32_0 = arith.constant 0 : i32
    %c0_i32_1 = arith.constant 0 : i32
    return %c0_i32, %c0_i32_0 : i32, i32
  }
  func.func @transform_4(%arg0: i32) -> (i32, i32) {
    %c0_i32 = arith.constant 0 : i32
    %c0_i32_0 = arith.constant 0 : i32
    %c0_i32_1 = arith.constant 0 : i32
    return %c0_i32, %c0_i32_0 : i32, i32
  }
  func.func @transform_5(%arg0: i32) -> (i32, i32) {
    %c0_i32 = arith.constant 0 : i32
    %c0_i32_0 = arith.constant 0 : i32
    %c0_i32_1 = arith.constant 0 : i32
    return %c0_i32, %c0_i32_0 : i32, i32
  }
  func.func @transform_6(%arg0: i32) -> (i32, i32) {
    %c0_i32 = arith.constant 0 : i32
    %c0_i32_0 = arith.constant 0 : i32
    %c0_i32_1 = arith.constant 0 : i32
    return %c0_i32, %c0_i32_0 : i32, i32
  }
  func.func @transform_7(%arg0: i32) -> (i32, i32, i32) {
    %c0_i32 = arith.constant 0 : i32
    %c0_i32_0 = arith.constant 0 : i32
    %c0_i32_1 = arith.constant 0 : i32
    return %arg0, %c0_i32, %c0_i32_0 : i32, i32, i32
  }
}

</mosaic_0001>

<llo_original>
// kernel: tpu_custom_call.1
$region0: #{tpu_custom_call.1}
  #allocation0 [shape = 'u32[]', space=smem, size = 0x4, offset = 0x4, fixed_abs, tag = 'smem constant byte address 0x4 - core index']
  #allocation1 [shape = 'u32[144,128]{1,0:T(1,128)}', space=vmem, size = 0x12000, scoped, tag = 'internal scratch']
  %s0 = inlined_call_operand.vmem [shape: f32[2,4,256], index: 0, kind: input, shape index: {}]
  %s1 = inlined_call_operand.vmem [shape: f32[24,4], index: 1, kind: input, shape index: {}]
  %s2 = inlined_call_operand.vmem [shape: f32[24,9], index: 2, kind: input, shape index: {}]
  %s3 = inlined_call_operand.vmem [shape: f32[4,24], index: 3, kind: input, shape index: {}]
  %s4 = inlined_call_operand.vmem [shape: f32[24,4], index: 4, kind: input, shape index: {}]
  %s5 = inlined_call_operand.vmem [shape: f32[4,2], index: 5, kind: input, shape index: {}]
  %s6 = inlined_call_operand.vmem [shape: f32[9,256], index: 6, kind: input, shape index: {}]
  %s7 = inlined_call_operand.hbm [shape: f32[2,4,256], index: 7, kind: output, shape index: {}]
  %s8 = sld [smem:[#allocation0]]
  $region61: #{tpu_custom_call.1} parent=0
    _
  %s10 = ssub.s32 1, %s8
  %s11 = scalar_select 0, %s10, %s8
  $region1: #{tpu_custom_call.1} parent=0
    #allocation2 [shape = 'u8[8192]{0}', space=vmem, size = 0x2000, scoped, tag = 'output window, operand 0']
    #allocation3 [shape = 's32[2]{0}', space=sflag, size = 0x8, scoped, tag = 'scoped memory for tpu_custom_call.1']
    %12 = vsyncpa [#allocation3], 0
    %s13 = scalar_lea.sflag [#allocation3], 1
    %14 = vsyncpa %s13, 0
    loop: start=0, step=1, limit=4
    $region2: #{tpu_custom_call.1} parent=1 // loop_pre_header
      _
    $region3: #{tpu_custom_call.1} parent=1 // loop_header
      %s16 = sphi 0, %s20
      %p17 = scmp.ge.s32.totalorder %s16, 4
      %s26 = sphi 0, %s28
      %s29 = sphi 0, %s26
      %s30 = sphi 0, %s29
      %s46 = sphi 0, %s30
      %s50 = sphi 0, %s50
      %s52 = sphi 0, %s50
      %s53 = sphi 0, %s52
      %s67 = sphi 0, %s53
      %s71 = sphi 0, %s71
      %s73 = sphi 0, %s71
      %s74 = sphi 0, %s73
      %s88 = sphi 0, %s74
      %s92 = sphi 0, %s92
      %s94 = sphi 0, %s92
      %s95 = sphi 0, %s94
      %s109 = sphi 0, %s95
      %s113 = sphi 0, %s113
      %s115 = sphi 0, %s113
      %s116 = sphi 0, %s115
      %s130 = sphi 0, %s116
      %s134 = sphi 0, %s134
      %s136 = sphi 0, %s134
      %s137 = sphi 0, %s136
      %s151 = sphi 0, %s137
      %s155 = sphi 0, %s155
      %s157 = sphi 0, %s155
      %s158 = sphi 0, %s157
      %s172 = sphi 0, %s158
      %s178 = sphi 0, %s180
      %s181 = sphi 0, %s178
      %s182 = sphi 0, %s181
      %s198 = sphi 0, %s182
    $region4: #{tpu_custom_call.1} parent=1 // loop_header_branch
      %19 = sbr.rel (%p17) target = $region8
    $region5: #{tpu_custom_call.1} parent=1 // loop_body
      %s21 = ssub.s32 %s16, 1
      %s22 = ssub.s32 %s16, 2
      %s23 = sadd.s32 %s16, 1
      %s24 = ssub.s32 %s16, %s23
      %p25 = scmp.eq.s32.totalorder %s24, 0
      %s27 = sadd.s32 %s26, 1
      %s28 = scalar_select %p25, %s26, %s27
      %p31 = pneg %p25
      %p32 = scmp.eq.s32.totalorder %s16, 1
      %p33 = por %p31, %p32
      %p34 = scmp.ne.s32.totalorder %s26, %s29
      %p35 = scmp.eq.s32.totalorder %s16, 0
      %p36 = por %p34, %p35
      %p37 = scmp.ne.s32.totalorder %s26, %s29
      %p38 = scmp.eq.s32.totalorder %s21, 1
      %p39 = por %p37, %p38
      %p40 = scmp.ne.s32.totalorder %s29, %s30
      %p41 = scmp.eq.s32.totalorder %s21, 0
      %p42 = por %p40, %p41
      %p43 = scmp.ne.s32.totalorder %s29, %s30
      %p44 = scmp.eq.s32.totalorder %s22, 1
      %p45 = por %p43, %p44
      %p47 = scmp.ne.s32.totalorder %s30, %s46
      %p48 = scmp.eq.s32.totalorder %s22, 0
      %p49 = por %p47, %p48
      %s51 = sadd.s32 %s50, 1
      %p54 = scmp.eq.s32.totalorder %s16, 1
      %p55 = scmp.ne.s32.totalorder %s50, %s52
      %p56 = scmp.eq.s32.totalorder %s16, 0
      %p57 = por %p55, %p56
      %p58 = scmp.ne.s32.totalorder %s50, %s52
      %p59 = scmp.eq.s32.totalorder %s21, 1
      %p60 = por %p58, %p59
      %p61 = scmp.ne.s32.totalorder %s52, %s53
      %p62 = scmp.eq.s32.totalorder %s21, 0
      %p63 = por %p61, %p62
      %p64 = scmp.ne.s32.totalorder %s52, %s53
      %p65 = scmp.eq.s32.totalorder %s22, 1
      %p66 = por %p64, %p65
      %p68 = scmp.ne.s32.totalorder %s53, %s67
      %p69 = scmp.eq.s32.totalorder %s22, 0
      %p70 = por %p68, %p69
      %s72 = sadd.s32 %s71, 1
      %p75 = scmp.eq.s32.totalorder %s16, 1
      %p76 = scmp.ne.s32.totalorder %s71, %s73
      %p77 = scmp.eq.s32.totalorder %s16, 0
      %p78 = por %p76, %p77
      %p79 = scmp.ne.s32.totalorder %s71, %s73
      %p80 = scmp.eq.s32.totalorder %s21, 1
      %p81 = por %p79, %p80
      %p82 = scmp.ne.s32.totalorder %s73, %s74
      %p83 = scmp.eq.s32.totalorder %s21, 0
      %p84 = por %p82, %p83
      %p85 = scmp.ne.s32.totalorder %s73, %s74
      %p86 = scmp.eq.s32.totalorder %s22, 1
      %p87 = por %p85, %p86
      %p89 = scmp.ne.s32.totalorder %s74, %s88
      %p90 = scmp.eq.s32.totalorder %s22, 0
      %p91 = por %p89, %p90
      %s93 = sadd.s32 %s92, 1
      %p96 = scmp.eq.s32.totalorder %s16, 1
      %p97 = scmp.ne.s32.totalorder %s92, %s94
      %p98 = scmp.eq.s32.totalorder %s16, 0
      %p99 = por %p97, %p98
      %p100 = scmp.ne.s32.totalorder %s92, %s94
      %p101 = scmp.eq.s32.totalorder %s21, 1
      %p102 = por %p100, %p101
      %p103 = scmp.ne.s32.totalorder %s94, %s95
      %p104 = scmp.eq.s32.totalorder %s21, 0
      %p105 = por %p103, %p104
      %p106 = scmp.ne.s32.totalorder %s94, %s95
      %p107 = scmp.eq.s32.totalorder %s22, 1
      %p108 = por %p106, %p107
      %p110 = scmp.ne.s32.totalorder %s95, %s109
      %p111 = scmp.eq.s32.totalorder %s22, 0
      %p112 = por %p110, %p111
      %s114 = sadd.s32 %s113, 1
      %p117 = scmp.eq.s32.totalorder %s16, 1
      %p118 = scmp.ne.s32.totalorder %s113, %s115
      %p119 = scmp.eq.s32.totalorder %s16, 0
      %p120 = por %p118, %p119
      %p121 = scmp.ne.s32.totalorder %s113, %s115
      %p122 = scmp.eq.s32.totalorder %s21, 1
      %p123 = por %p121, %p122
      %p124 = scmp.ne.s32.totalorder %s115, %s116
      %p125 = scmp.eq.s32.totalorder %s21, 0
      %p126 = por %p124, %p125
      %p127 = scmp.ne.s32.totalorder %s115, %s116
      %p128 = scmp.eq.s32.totalorder %s22, 1
      %p129 = por %p127, %p128
      %p131 = scmp.ne.s32.totalorder %s116, %s130
      %p132 = scmp.eq.s32.totalorder %s22, 0
      %p133 = por %p131, %p132
      %s135 = sadd.s32 %s134, 1
      %p138 = scmp.eq.s32.totalorder %s16, 1
      %p139 = scmp.ne.s32.totalorder %s134, %s136
      %p140 = scmp.eq.s32.totalorder %s16, 0
      %p141 = por %p139, %p140
      %p142 = scmp.ne.s32.totalorder %s134, %s136
      %p143 = scmp.eq.s32.totalorder %s21, 1
      %p144 = por %p142, %p143
      %p145 = scmp.ne.s32.totalorder %s136, %s137
      %p146 = scmp.eq.s32.totalorder %s21, 0
      %p147 = por %p145, %p146
      %p148 = scmp.ne.s32.totalorder %s136, %s137
      %p149 = scmp.eq.s32.totalorder %s22, 1
      %p150 = por %p148, %p149
      %p152 = scmp.ne.s32.totalorder %s137, %s151
      %p153 = scmp.eq.s32.totalorder %s22, 0
      %p154 = por %p152, %p153
      %s156 = sadd.s32 %s155, 1
      %p159 = scmp.eq.s32.totalorder %s16, 1
      %p160 = scmp.ne.s32.totalorder %s155, %s157
      %p161 = scmp.eq.s32.totalorder %s16, 0
      %p162 = por %p160, %p161
      %p163 = scmp.ne.s32.totalorder %s155, %s157
      %p164 = scmp.eq.s32.totalorder %s21, 1
      %p165 = por %p163, %p164
      %p166 = scmp.ne.s32.totalorder %s157, %s158
      %p167 = scmp.eq.s32.totalorder %s21, 0
      %p168 = por %p166, %p167
      %p169 = scmp.ne.s32.totalorder %s157, %s158
      %p170 = scmp.eq.s32.totalorder %s22, 1
      %p171 = por %p169, %p170
      %p173 = scmp.ne.s32.totalorder %s158, %s172
      %p174 = scmp.eq.s32.totalorder %s22, 0
      %p175 = por %p173, %p174
      %s176 = ssub.s32 %s16, %s23
      %p177 = scmp.eq.s32.totalorder %s176, 0
      %s179 = sadd.s32 %s178, 1
      %s180 = scalar_select %p177, %s178, %s179
      %p183 = pneg %p177
      %p184 = scmp.eq.s32.totalorder %s16, 1
      %p185 = por %p183, %p184
      %p186 = scmp.ne.s32.totalorder %s178, %s181
      %p187 = scmp.eq.s32.totalorder %s16, 0
      %p188 = por %p186, %p187
      %p189 = scmp.ne.s32.totalorder %s178, %s181
      %p190 = scmp.eq.s32.totalorder %s21, 1
      %p191 = por %p189, %p190
      %p192 = scmp.ne.s32.totalorder %s181, %s182
      %p193 = scmp.eq.s32.totalorder %s21, 0
      %p194 = por %p192, %p193
      %p195 = scmp.ne.s32.totalorder %s181, %s182
      %p196 = scmp.eq.s32.totalorder %s22, 1
      %p197 = por %p195, %p196
      %p199 = scmp.ne.s32.totalorder %s182, %s198
      %p200 = scmp.eq.s32.totalorder %s22, 0
      %p201 = por %p199, %p200
      %p202 = scmp.le.s32.totalorder 1, %s16
      %p203 = scmp.lt.s32.totalorder %s16, 3
      %p204 = pnand %p202, %p203
      %p205 = pneg %p204
      // Predicated region
      $region9: #{tpu_custom_call.1} parent=5 // pred_check
        _
      $region10: #{tpu_custom_call.1} parent=5 // pred_check_branch
        %207 = sbr.rel (%p204) target = $region12
      $region11: #{tpu_custom_call.1} parent=5 // pred_region
        %s208 = ssub.s32 %s16, 1
        // Predicated region
        $region13: #{tpu_custom_call.1} parent=11 // pred_check
          %p209 = pneg %p63
        $region14: #{tpu_custom_call.1} parent=11 // pred_check_branch
          %211 = sbr.rel (%p209) target = $region16
        $region15: #{tpu_custom_call.1} parent=11 // pred_region
          _
        $region16: #{tpu_custom_call.1} parent=11 // pred_fallthru
          _
        // Predicated region
        $region17: #{tpu_custom_call.1} parent=11 // pred_check
          %p212 = pneg %p84
        $region18: #{tpu_custom_call.1} parent=11 // pred_check_branch
          %214 = sbr.rel (%p212) target = $region20
        $region19: #{tpu_custom_call.1} parent=11 // pred_region
          _
        $region20: #{tpu_custom_call.1} parent=11 // pred_fallthru
          _
        // Predicated region
        $region21: #{tpu_custom_call.1} parent=11 // pred_check
          %p215 = pneg %p105
        $region22: #{tpu_custom_call.1} parent=11 // pred_check_branch
          %217 = sbr.rel (%p215) target = $region24
        $region23: #{tpu_custom_call.1} parent=11 // pred_region
          _
        $region24: #{tpu_custom_call.1} parent=11 // pred_fallthru
          _
        // Predicated region
        $region25: #{tpu_custom_call.1} parent=11 // pred_check
          %p218 = pneg %p126
        $region26: #{tpu_custom_call.1} parent=11 // pred_check_branch
          %220 = sbr.rel (%p218) target = $region28
        $region27: #{tpu_custom_call.1} parent=11 // pred_region
          _
        $region28: #{tpu_custom_call.1} parent=11 // pred_fallthru
          _
        // Predicated region
        $region29: #{tpu_custom_call.1} parent=11 // pred_check
          %p221 = pneg %p147
        $region30: #{tpu_custom_call.1} parent=11 // pred_check_branch
          %223 = sbr.rel (%p221) target = $region32
        $region31: #{tpu_custom_call.1} parent=11 // pred_region
          _
        $region32: #{tpu_custom_call.1} parent=11 // pred_fallthru
          _
        // Predicated region
        $region33: #{tpu_custom_call.1} parent=11 // pred_check
          %p224 = pneg %p168
        $region34: #{tpu_custom_call.1} parent=11 // pred_check_branch
          %226 = sbr.rel (%p224) target = $region36
        $region35: #{tpu_custom_call.1} parent=11 // pred_region
          _
        $region36: #{tpu_custom_call.1} parent=11 // pred_fallthru
          _
      $region12: #{tpu_custom_call.1} parent=5 // pred_fallthru
        _
      %p227 = scmp.lt.s32.totalorder %s16, 2
      // Predicated region
      $region37: #{tpu_custom_call.1} parent=5 // pred_check
        %p228 = pneg %p227
      $region38: #{tpu_custom_call.1} parent=5 // pred_check_branch
        %230 = sbr.rel (%p228) target = $region40
      $region39: #{tpu_custom_call.1} parent=5 // pred_region
        // Predicated region
        $region41: #{tpu_custom_call.1} parent=39 // pred_check
          %p231 = pneg %p36
        $region42: #{tpu_custom_call.1} parent=39 // pred_check_branch
          %233 = sbr.rel (%p231) target = $region44
        $region43: #{tpu_custom_call.1} parent=39 // pred_region
          %p234 = scmp.lt.s32.totalorder %s16, 1
          %s235 = scalar_select %p234, %s16, 1
          %s236 = smul.addr %s235, 2
          %s237 = smul.addr %s236, 4
          %s238 = scalar_lea.vmem %s0, %s237
        $region44: #{tpu_custom_call.1} parent=39 // pred_fallthru
          _
      $region40: #{tpu_custom_call.1} parent=5 // pred_fallthru
        _
      %p239 = scmp.le.s32.totalorder 1, %s16
      %p240 = scmp.lt.s32.totalorder %s16, 3
      %p241 = pnand %p239, %p240
      %p242 = pneg %p241
      // Predicated region
      $region45: #{tpu_custom_call.1} parent=5 // pred_check
        _
      $region46: #{tpu_custom_call.1} parent=5 // pred_check_branch
        %244 = sbr.rel (%p241) target = $region48
      $region47: #{tpu_custom_call.1} parent=5 // pred_region
        %s245 = ssub.s32 %s16, 1
        %p246 = scmp.lt.s32.totalorder %s21, 1
        %s247 = scalar_select %p246, %s21, 1
        %s248 = smul.addr %s247, 2
        %s249 = smul.addr %s248, 4
        %s250 = scalar_lea.vmem %s0, %s249
        %p251 = pneg %p42
        %p252 = pneg %p39
        %p253 = pneg %p63
        %p254 = pneg %p60
        %p255 = pneg %p84
        %p256 = pneg %p81
        %p257 = pneg %p105
        %p258 = pneg %p102
        %p259 = pneg %p126
        %p260 = pneg %p123
        %p261 = pneg %p147
        %p262 = pneg %p144
        %p263 = pneg %p168
        %p264 = pneg %p165
        %p265 = pneg %p194
        %p266 = pneg %p191
        %s267 = sand.u32 %s181, 1
        %s268 = scalar_lea.sflag [#allocation3], %s267
        %s269 = sand.u32 %s181, 1
        %s270 = smul.addr %s269, 8
        %s271 = scalar_lea.vmem [#allocation2], %s270
        %p272 = scmp.lt.s32.totalorder %s21, 1
        %s273 = scalar_select %p272, %s21, 1
        %s274 = smul.addr %s273, 2
        %s275 = smul.addr %s274, 4
        %s276 = scalar_lea.vmem %s0, %s275
        %v277 = vld [vmem:[%s276] sm:$0xff]
        %v278 = vld [vmem:[%s1] sm:$0xff]
        %v279 = vld [vmem:[%s1 + $0x8] sm:$0xff]
        %v280 = vld [vmem:[%s1 + $0x10] sm:$0xff]
        %v282 = vcombine.high %v277, %v277
        %vm283 = vcmask 31744
        %v285 = vsel %vm283, %v278, 0
        %v288 = vsel %vm283, %v279, 0
        %v291 = vsel %vm283, %v280, 0
        %vm293 = vcmask 1043456
        %v294 = vsel %vm293, %v277, 0
        %v296 = vsel %vm293, %v282, 0
        %298 = vmatprep.subr.mxu0 0.0
        %299 = vmatpush1.msra.mxu0 0.0
        %300 = vmatprep.subr.mxu0 0.0
        %301 = vmatpush1.msra.mxu0 0.0
        %302 = vmatprep.subr.mxu0 0.0
        %303 = vmatpush1.msra.mxu0 0.0
        %304 = vmatprep.subr.mxu0 0.0
        %305 = vmatpush1.msra.mxu0 0.0
        %306 = vmatprep.subr.mxu0 0.0
        %307 = vmatpush1.msra.mxu0 0.0
        %308 = vmatprep.subr.mxu0 0.0
        %309 = vmatpush1.msra.mxu0 0.0
        %310 = vmatprep.subr.mxu0 0.0
        %311 = vmatpush1.msra.mxu0 0.0
        %312 = vmatprep.subr.mxu0 0.0
        %313 = vmatpush1.msra.mxu0 0.0
        %314 = vmatprep.subr.mxu0 0.0
        %315 = vmatpush1.msra.mxu0 0.0
        %316 = vmatprep.subr.mxu0 0.0
        %317 = vmatpush1.msra.mxu0 0.0
        %318 = vmatprep.subr.mxu0 0.0
        %319 = vmatpush1.msra.mxu0 0.0
        %320 = vmatprep.subr.mxu0 0.0
        %321 = vmatpush1.msra.mxu0 0.0
        %322 = vmatprep.subr.mxu0 0.0
        %323 = vmatpush1.msra.mxu0 0.0
        %324 = vmatprep.subr.mxu0 0.0
        %325 = vmatpush1.msra.mxu0 0.0
        %326 = vmatprep.subr.mxu0 0.0
        %327 = vmatpush1.msra.mxu0 0.0
        %328 = vmatprep.subr.mxu0 %v296
        %329 = vmatpush1.msra.mxu0 %v294
        %330 = vmatprep.subr.mxu0 0.0
        %331 = vmatpush2.msra.mxu0 0.0
        %332 = vmatprep.subr.mxu0 0.0
        %333 = vmatpush2.msra.mxu0 0.0
        %334 = vmatprep.subr.mxu0 0.0
        %335 = vmatpush2.msra.mxu0 0.0
        %336 = vmatprep.subr.mxu0 0.0
        %337 = vmatpush2.msra.mxu0 0.0
        %338 = vmatprep.subr.mxu0 0.0
        %339 = vmatpush2.msra.mxu0 0.0
        %340 = vmatprep.subr.mxu0 0.0
        %341 = vmatpush2.msra.mxu0 0.0
        %342 = vmatprep.subr.mxu0 0.0
        %343 = vmatpush2.msra.mxu0 0.0
        %344 = vmatprep.subr.mxu0 0.0
        %345 = vmatpush2.msra.mxu0 0.0
        %346 = vmatprep.subr.mxu0 0.0
        %347 = vmatpush2.msra.mxu0 0.0
        %348 = vmatprep.subr.mxu0 0.0
        %349 = vmatpush2.msra.mxu0 0.0
        %350 = vmatprep.subr.mxu0 0.0
        %351 = vmatpush2.msra.mxu0 0.0
        %352 = vmatprep.subr.mxu0 0.0
        %353 = vmatpush2.msra.mxu0 0.0
        %354 = vmatprep.subr.mxu0 0.0
        %355 = vmatpush2.msra.mxu0 0.0
        %356 = vmatprep.subr.mxu0 0.0
        %357 = vmatpush2.msra.mxu0 0.0
        %358 = vmatprep.subr.mxu0 0.0
        %359 = vmatpush2.msra.mxu0 0.0
        %360 = vmatprep.subr.mxu0 0.0
        %361 = vmatpush2.msra.mxu0 0.0
        %362 = vmatprep.mubr.f32.mxu0 0.0
        %363 = vmatmul.mubr.f32.gmra.mxu0 %v285
        %v364 = vpop.f32.mrf.mxu0
        %v365 = vadd.f32 0.0, %v364
        %v366 = vpop.f32.mrf.mxu0
        %v367 = vadd.f32 0.0, %v366
        %368 = vmatprep.mubr.f32.mxu0 0.0
        %369 = vmatmul.mubr.f32.gmra.mxu0 %v288
        %v370 = vpop.f32.mrf.mxu0
        %v371 = vadd.f32 0.0, %v370
        %v372 = vpop.f32.mrf.mxu0
        %v373 = vadd.f32 0.0, %v372
        %374 = vmatprep.mubr.f32.mxu0 0.0
        %375 = vmatmul.mubr.f32.gmra.mxu0 %v291
        %v376 = vpop.f32.mrf.mxu0
        %v377 = vadd.f32 0.0, %v376
        %v378 = vpop.f32.mrf.mxu0
        %v379 = vadd.f32 0.0, %v378
        %380 = vdwg.mxu0
        %v381 = vld [vmem:[%s4] sm:$0xff]
        %v382 = vld [vmem:[%s4 + $0x8] sm:$0xff]
        %v383 = vld [vmem:[%s4 + $0x10] sm:$0xff]
        %385 = vset.pattern.permute.xlu0 0
        %386 = vperm.xlu0 %385, %v381
        %v387 = vpop.permute.xlu0 %386
        %390 = vset.pattern.permute.xlu0 0
        %391 = vperm.xlu0 %390, %v382
        %v392 = vpop.permute.xlu0 %391
        %395 = vset.pattern.permute.xlu0 0
        %396 = vperm.xlu0 %395, %v383
        %v397 = vpop.permute.xlu0 %396
        %v399 = vmul.f32 %v365, %v387
        %v400 = vmul.f32 %v367, %v387
        %v401 = vmul.f32 %v371, %v392
        %v402 = vmul.f32 %v373, %v392
        %v403 = vmul.f32 %v377, %v397
        %v404 = vmul.f32 %v379, %v397
        %405 = vset.pattern.permute.xlu0 1
        %406 = vperm.xlu0 %405, %v381
        %v407 = vpop.permute.xlu0 %406
        %409 = vset.pattern.permute.xlu0 1
        %410 = vperm.xlu0 %409, %v382
        %v411 = vpop.permute.xlu0 %410
        %413 = vset.pattern.permute.xlu0 1
        %414 = vperm.xlu0 %413, %v383
        %v415 = vpop.permute.xlu0 %414
        %v417 = vadd.f32 %v399, %v407
        %v418 = vadd.f32 %v400, %v407
        %v419 = vadd.f32 %v401, %v411
        %v420 = vadd.f32 %v402, %v411
        %v421 = vadd.f32 %v403, %v415
        %v422 = vadd.f32 %v404, %v415
        %v423 = vmax.f32 %v417, 0.0
        %v424 = vmax.f32 %v418, 0.0
        %v425 = vmax.f32 %v419, 0.0
        %v426 = vmax.f32 %v420, 0.0
        %v427 = vmax.f32 %v421, 0.0
        %v428 = vmax.f32 %v422, 0.0
        %429 = vrot.lane.b32.xlu0 %v423, 17
        %v430 = vpop.permute.xlu0 %429
        %431 = vrot.lane.b32.xlu0 %v425, 17
        %v432 = vpop.permute.xlu0 %431
        %433 = vrot.lane.b32.xlu0 %v427, 17
        %v434 = vpop.permute.xlu0 %433
        %435 = vrot.lane.b32.xlu0 %v424, 17
        %v436 = vpop.permute.xlu0 %435
        %437 = vrot.lane.b32.xlu0 %v426, 17
        %v438 = vpop.permute.xlu0 %437
        %439 = vrot.lane.b32.xlu0 %v428, 17
        %v440 = vpop.permute.xlu0 %439
        %v441 = vlaneseq
        %v442 = vand.u32 %v441, 127
        %vm443 = vcmp.lt.s32.totalorder %v442, 17
        %v444 = vsel %vm443, %v430, %v436
        %v445 = vsel %vm443, %v432, %v438
        %v446 = vsel %vm443, %v434, %v440
        %v447 = vsel %vm443, %v436, %v430
        %v448 = vsel %vm443, %v438, %v432
        %v449 = vsel %vm443, %v440, %v434
        %v450 = vld [vmem:[%s6] ss:$8 sm:$0x3]
        %v452 = vlaneseq
        %v453 = vshrl.u32 %v452, 7
        %v454 = vsub.s32 0, %v453
        %v455 = vrot.slane %v450, %v454
        %v456 = vlaneseq
        %v457 = vshrl.u32 %v456, 7
        %v458 = vsub.s32 1, %v457
        %v459 = vrot.slane %v450, %v458
        %v462 = vmul.f32 %v447, %v455
        %v463 = vmul.f32 %v444, %v459
        %v464 = vmul.f32 %v448, %v455
        %v465 = vmul.f32 %v445, %v459
        %v466 = vmul.f32 %v449, %v455
        %v467 = vmul.f32 %v446, %v459
        %v468 = vld [vmem:[%s2] sm:$0xff]
        %v469 = vld [vmem:[%s2 + $0x8] sm:$0xff]
        %v470 = vld [vmem:[%s2 + $0x10] sm:$0xff]
        %472 = vset.pattern.permute.xlu0 0
        %473 = vperm.xlu0 %472, %v468
        %v474 = vpop.permute.xlu0 %473
        %477 = vset.pattern.permute.xlu0 0
        %478 = vperm.xlu0 %477, %v469
        %v479 = vpop.permute.xlu0 %478
        %482 = vset.pattern.permute.xlu0 0
        %483 = vperm.xlu0 %482, %v470
        %v484 = vpop.permute.xlu0 %483
        %v486 = vmul.f32 %v462, %v474
        %v487 = vmul.f32 %v463, %v474
        %v488 = vmul.f32 %v464, %v479
        %v489 = vmul.f32 %v465, %v479
        %v490 = vmul.f32 %v466, %v484
        %v491 = vmul.f32 %v467, %v484
        %492 = vrot.lane.b32.xlu0 %v423, 16
        %v493 = vpop.permute.xlu0 %492
        %494 = vrot.lane.b32.xlu0 %v425, 16
        %v495 = vpop.permute.xlu0 %494
        %496 = vrot.lane.b32.xlu0 %v427, 16
        %v497 = vpop.permute.xlu0 %496
        %498 = vrot.lane.b32.xlu0 %v424, 16
        %v499 = vpop.permute.xlu0 %498
        %500 = vrot.lane.b32.xlu0 %v426, 16
        %v501 = vpop.permute.xlu0 %500
        %502 = vrot.lane.b32.xlu0 %v428, 16
        %v503 = vpop.permute.xlu0 %502
        %vm504 = vcmp.lt.s32.totalorder %v442, 16
        %v505 = vsel %vm504, %v493, %v499
        %v506 = vsel %vm504, %v495, %v501
        %v507 = vsel %vm504, %v497, %v503
        %v508 = vsel %vm504, %v499, %v493
        %v509 = vsel %vm504, %v501, %v495
        %v510 = vsel %vm504, %v503, %v497
        %s511 = scalar_lea.vmem %s6, 1
        %v512 = vld [vmem:[%s511] ss:$8 sm:$0x3]
        %v514 = vlaneseq
        %v515 = vshrl.u32 %v514, 7
        %v516 = vsub.s32 0, %v515
        %v517 = vrot.slane %v512, %v516
        %v518 = vlaneseq
        %v519 = vshrl.u32 %v518, 7
        %v520 = vsub.s32 1, %v519
        %v521 = vrot.slane %v512, %v520
        %v524 = vmul.f32 %v508, %v517
        %v525 = vmul.f32 %v505, %v521
        %v526 = vmul.f32 %v509, %v517
        %v527 = vmul.f32 %v506, %v521
        %v528 = vmul.f32 %v510, %v517
        %v529 = vmul.f32 %v507, %v521
        %530 = vset.pattern.permute.xlu0 1
        %531 = vperm.xlu0 %530, %v468
        %v532 = vpop.permute.xlu0 %531
        %534 = vset.pattern.permute.xlu0 1
        %535 = vperm.xlu0 %534, %v469
        %v536 = vpop.permute.xlu0 %535
        %538 = vset.pattern.permute.xlu0 1
        %539 = vperm.xlu0 %538, %v470
        %v540 = vpop.permute.xlu0 %539
        %v542 = vmul.f32 %v524, %v532
        %v543 = vmul.f32 %v525, %v532
        %v544 = vmul.f32 %v526, %v536
        %v545 = vmul.f32 %v527, %v536
        %v546 = vmul.f32 %v528, %v540
        %v547 = vmul.f32 %v529, %v540
        %v548 = vadd.f32 %v486, %v542
        %v549 = vadd.f32 %v487, %v543
        %v550 = vadd.f32 %v488, %v544
        %v551 = vadd.f32 %v489, %v545
        %v552 = vadd.f32 %v490, %v546
        %v553 = vadd.f32 %v491, %v547
        %554 = vrot.lane.b32.xlu0 %v423, 15
        %v555 = vpop.permute.xlu0 %554
        %556 = vrot.lane.b32.xlu0 %v425, 15
        %v557 = vpop.permute.xlu0 %556
        %558 = vrot.lane.b32.xlu0 %v427, 15
        %v559 = vpop.permute.xlu0 %558
        %560 = vrot.lane.b32.xlu0 %v424, 15
        %v561 = vpop.permute.xlu0 %560
        %562 = vrot.lane.b32.xlu0 %v426, 15
        %v563 = vpop.permute.xlu0 %562
        %564 = vrot.lane.b32.xlu0 %v428, 15
        %v565 = vpop.permute.xlu0 %564
        %vm566 = vcmp.lt.s32.totalorder %v442, 15
        %v567 = vsel %vm566, %v555, %v561
        %v568 = vsel %vm566, %v557, %v563
        %v569 = vsel %vm566, %v559, %v565
        %v570 = vsel %vm566, %v561, %v555
        %v571 = vsel %vm566, %v563, %v557
        %v572 = vsel %vm566, %v565, %v559
        %s573 = scalar_lea.vmem %s6, 2
        %v574 = vld [vmem:[%s573] ss:$8 sm:$0x3]
        %v576 = vlaneseq
        %v577 = vshrl.u32 %v576, 7
        %v578 = vsub.s32 0, %v577
        %v579 = vrot.slane %v574, %v578
        %v580 = vlaneseq
        %v581 = vshrl.u32 %v580, 7
        %v582 = vsub.s32 1, %v581
        %v583 = vrot.slane %v574, %v582
        %v586 = vmul.f32 %v570, %v579
        %v587 = vmul.f32 %v567, %v583
        %v588 = vmul.f32 %v571, %v579
        %v589 = vmul.f32 %v568, %v583
        %v590 = vmul.f32 %v572, %v579
        %v591 = vmul.f32 %v569, %v583
        %592 = vset.pattern.permute.xlu0 2
        %593 = vperm.xlu0 %592, %v468
        %v594 = vpop.permute.xlu0 %593
        %596 = vset.pattern.permute.xlu0 2
        %597 = vperm.xlu0 %596, %v469
        %v598 = vpop.permute.xlu0 %597
        %600 = vset.pattern.permute.xlu0 2
        %601 = vperm.xlu0 %600, %v470
        %v602 = vpop.permute.xlu0 %601
        %v604 = vmul.f32 %v586, %v594
        %v605 = vmul.f32 %v587, %v594
        %v606 = vmul.f32 %v588, %v598
        %v607 = vmul.f32 %v589, %v598
        %v608 = vmul.f32 %v590, %v602
        %v609 = vmul.f32 %v591, %v602
        %v610 = vadd.f32 %v548, %v604
        %v611 = vadd.f32 %v549, %v605
        %v612 = vadd.f32 %v550, %v606
        %v613 = vadd.f32 %v551, %v607
        %v614 = vadd.f32 %v552, %v608
        %v615 = vadd.f32 %v553, %v609
        %616 = vrot.lane.b32.xlu0 %v423, 1
        %v617 = vpop.permute.xlu0 %616
        %618 = vrot.lane.b32.xlu0 %v425, 1
        %v619 = vpop.permute.xlu0 %618
        %620 = vrot.lane.b32.xlu0 %v427, 1
        %v621 = vpop.permute.xlu0 %620
        %622 = vrot.lane.b32.xlu0 %v424, 1
        %v623 = vpop.permute.xlu0 %622
        %624 = vrot.lane.b32.xlu0 %v426, 1
        %v625 = vpop.permute.xlu0 %624
        %626 = vrot.lane.b32.xlu0 %v428, 1
        %v627 = vpop.permute.xlu0 %626
        %vm628 = vcmp.lt.s32.totalorder %v442, 1
        %v629 = vsel %vm628, %v617, %v623
        %v630 = vsel %vm628, %v619, %v625
        %v631 = vsel %vm628, %v621, %v627
        %v632 = vsel %vm628, %v623, %v617
        %v633 = vsel %vm628, %v625, %v619
        %v634 = vsel %vm628, %v627, %v621
        %s635 = scalar_lea.vmem %s6, 3
        %v636 = vld [vmem:[%s635] ss:$8 sm:$0x3]
        %v638 = vlaneseq
        %v639 = vshrl.u32 %v638, 7
        %v640 = vsub.s32 0, %v639
        %v641 = vrot.slane %v636, %v640
        %v642 = vlaneseq
        %v643 = vshrl.u32 %v642, 7
        %v644 = vsub.s32 1, %v643
        %v645 = vrot.slane %v636, %v644
        %v648 = vmul.f32 %v632, %v641
        %v649 = vmul.f32 %v629, %v645
        %v650 = vmul.f32 %v633, %v641
        %v651 = vmul.f32 %v630, %v645
        %v652 = vmul.f32 %v634, %v641
        %v653 = vmul.f32 %v631, %v645
        %654 = vset.pattern.permute.xlu0 3
        %655 = vperm.xlu0 %654, %v468
        %v656 = vpop.permute.xlu0 %655
        %658 = vset.pattern.permute.xlu0 3
        %659 = vperm.xlu0 %658, %v469
        %v660 = vpop.permute.xlu0 %659
        %662 = vset.pattern.permute.xlu0 3
        %663 = vperm.xlu0 %662, %v470
        %v664 = vpop.permute.xlu0 %663
        %v666 = vmul.f32 %v648, %v656
        %v667 = vmul.f32 %v649, %v656
        %v668 = vmul.f32 %v650, %v660
        %v669 = vmul.f32 %v651, %v660
        %v670 = vmul.f32 %v652, %v664
        %v671 = vmul.f32 %v653, %v664
        %v672 = vadd.f32 %v610, %v666
        %v673 = vadd.f32 %v611, %v667
        %v674 = vadd.f32 %v612, %v668
        %v675 = vadd.f32 %v613, %v669
        %v676 = vadd.f32 %v614, %v670
        %v677 = vadd.f32 %v615, %v671
        %678 = vset.pattern.permute.xlu0 4
        %679 = vperm.xlu0 %678, %v468
        %v680 = vpop.permute.xlu0 %679
        %682 = vset.pattern.permute.xlu0 4
        %683 = vperm.xlu0 %682, %v469
        %v684 = vpop.permute.xlu0 %683
        %686 = vset.pattern.permute.xlu0 4
        %687 = vperm.xlu0 %686, %v470
        %v688 = vpop.permute.xlu0 %687
        %v690 = vmul.f32 %v423, %v680
        %v691 = vmul.f32 %v424, %v680
        %v692 = vmul.f32 %v425, %v684
        %v693 = vmul.f32 %v426, %v684
        %v694 = vmul.f32 %v427, %v688
        %v695 = vmul.f32 %v428, %v688
        %v696 = vadd.f32 %v672, %v690
        %v697 = vadd.f32 %v673, %v691
        %v698 = vadd.f32 %v674, %v692
        %v699 = vadd.f32 %v675, %v693
        %v700 = vadd.f32 %v676, %v694
        %v701 = vadd.f32 %v677, %v695
        %702 = vrot.lane.b32.xlu0 %v423, 127
        %v703 = vpop.permute.xlu0 %702
        %704 = vrot.lane.b32.xlu0 %v425, 127
        %v705 = vpop.permute.xlu0 %704
        %706 = vrot.lane.b32.xlu0 %v427, 127
        %v707 = vpop.permute.xlu0 %706
        %708 = vrot.lane.b32.xlu0 %v424, 127
        %v709 = vpop.permute.xlu0 %708
        %710 = vrot.lane.b32.xlu0 %v426, 127
        %v711 = vpop.permute.xlu0 %710
        %712 = vrot.lane.b32.xlu0 %v428, 127
        %v713 = vpop.permute.xlu0 %712
        %vm714 = vcmp.lt.s32.totalorder %v442, 127
        %v715 = vsel %vm714, %v703, %v709
        %v716 = vsel %vm714, %v705, %v711
        %v717 = vsel %vm714, %v707, %v713
        %v718 = vsel %vm714, %v709, %v703
        %v719 = vsel %vm714, %v711, %v705
        %v720 = vsel %vm714, %v713, %v707
        %s721 = scalar_lea.vmem %s6, 5
        %v722 = vld [vmem:[%s721] ss:$8 sm:$0x3]
        %v724 = vlaneseq
        %v725 = vshrl.u32 %v724, 7
        %v726 = vsub.s32 0, %v725
        %v727 = vrot.slane %v722, %v726
        %v728 = vlaneseq
        %v729 = vshrl.u32 %v728, 7
        %v730 = vsub.s32 1, %v729
        %v731 = vrot.slane %v722, %v730
        %v734 = vmul.f32 %v715, %v727
        %v735 = vmul.f32 %v718, %v731
        %v736 = vmul.f32 %v716, %v727
        %v737 = vmul.f32 %v719, %v731
        %v738 = vmul.f32 %v717, %v727
        %v739 = vmul.f32 %v720, %v731
        %740 = vset.pattern.permute.xlu0 5
        %741 = vperm.xlu0 %740, %v468
        %v742 = vpop.permute.xlu0 %741
        %744 = vset.pattern.permute.xlu0 5
        %745 = vperm.xlu0 %744, %v469
        %v746 = vpop.permute.xlu0 %745
        %748 = vset.pattern.permute.xlu0 5
        %749 = vperm.xlu0 %748, %v470
        %v750 = vpop.permute.xlu0 %749
        %v752 = vmul.f32 %v734, %v742
        %v753 = vmul.f32 %v735, %v742
        %v754 = vmul.f32 %v736, %v746
        %v755 = vmul.f32 %v737, %v746
        %v756 = vmul.f32 %v738, %v750
        %v757 = vmul.f32 %v739, %v750
        %v758 = vadd.f32 %v696, %v752
        %v759 = vadd.f32 %v697, %v753
        %v760 = vadd.f32 %v698, %v754
        %v761 = vadd.f32 %v699, %v755
        %v762 = vadd.f32 %v700, %v756
        %v763 = vadd.f32 %v701, %v757
        %764 = vrot.lane.b32.xlu0 %v423, 113
        %v765 = vpop.permute.xlu0 %764
        %766 = vrot.lane.b32.xlu0 %v425, 113
        %v767 = vpop.permute.xlu0 %766
        %768 = vrot.lane.b32.xlu0 %v427, 113
        %v769 = vpop.permute.xlu0 %768
        %770 = vrot.lane.b32.xlu0 %v424, 113
        %v771 = vpop.permute.xlu0 %770
        %772 = vrot.lane.b32.xlu0 %v426, 113
        %v773 = vpop.permute.xlu0 %772
        %774 = vrot.lane.b32.xlu0 %v428, 113
        %v775 = vpop.permute.xlu0 %774
        %vm776 = vcmp.lt.s32.totalorder %v442, 113
        %v777 = vsel %vm776, %v765, %v771
        %v778 = vsel %vm776, %v767, %v773
        %v779 = vsel %vm776, %v769, %v775
        %v780 = vsel %vm776, %v771, %v765
        %v781 = vsel %vm776, %v773, %v767
        %v782 = vsel %vm776, %v775, %v769
        %s783 = scalar_lea.vmem %s6, 6
        %v784 = vld [vmem:[%s783] ss:$8 sm:$0x3]
        %v786 = vlaneseq
        %v787 = vshrl.u32 %v786, 7
        %v788 = vsub.s32 0, %v787
        %v789 = vrot.slane %v784, %v788
        %v790 = vlaneseq
        %v791 = vshrl.u32 %v790, 7
        %v792 = vsub.s32 1, %v791
        %v793 = vrot.slane %v784, %v792
        %v796 = vmul.f32 %v777, %v789
        %v797 = vmul.f32 %v780, %v793
        %v798 = vmul.f32 %v778, %v789
        %v799 = vmul.f32 %v781, %v793
        %v800 = vmul.f32 %v779, %v789
        %v801 = vmul.f32 %v782, %v793
        %802 = vset.pattern.permute.xlu0 6
        %803 = vperm.xlu0 %802, %v468
        %v804 = vpop.permute.xlu0 %803
        %806 = vset.pattern.permute.xlu0 6
        %807 = vperm.xlu0 %806, %v469
        %v808 = vpop.permute.xlu0 %807
        %810 = vset.pattern.permute.xlu0 6
        %811 = vperm.xlu0 %810, %v470
        %v812 = vpop.permute.xlu0 %811
        %v814 = vmul.f32 %v796, %v804
        %v815 = vmul.f32 %v797, %v804
        %v816 = vmul.f32 %v798, %v808
        %v817 = vmul.f32 %v799, %v808
        %v818 = vmul.f32 %v800, %v812
        %v819 = vmul.f32 %v801, %v812
        %v820 = vadd.f32 %v758, %v814
        %v821 = vadd.f32 %v759, %v815
        %v822 = vadd.f32 %v760, %v816
        %v823 = vadd.f32 %v761, %v817
        %v824 = vadd.f32 %v762, %v818
        %v825 = vadd.f32 %v763, %v819
        %826 = vrot.lane.b32.xlu0 %v423, 112
        %v827 = vpop.permute.xlu0 %826
        %828 = vrot.lane.b32.xlu0 %v425, 112
        %v829 = vpop.permute.xlu0 %828
        %830 = vrot.lane.b32.xlu0 %v427, 112
        %v831 = vpop.permute.xlu0 %830
        %832 = vrot.lane.b32.xlu0 %v424, 112
        %v833 = vpop.permute.xlu0 %832
        %834 = vrot.lane.b32.xlu0 %v426, 112
        %v835 = vpop.permute.xlu0 %834
        %836 = vrot.lane.b32.xlu0 %v428, 112
        %v837 = vpop.permute.xlu0 %836
        %vm838 = vcmp.lt.s32.totalorder %v442, 112
        %v839 = vsel %vm838, %v827, %v833
        %v840 = vsel %vm838, %v829, %v835
        %v841 = vsel %vm838, %v831, %v837
        %v842 = vsel %vm838, %v833, %v827
        %v843 = vsel %vm838, %v835, %v829
        %v844 = vsel %vm838, %v837, %v831
        %s845 = scalar_lea.vmem %s6, 7
        %v846 = vld [vmem:[%s845] ss:$8 sm:$0x3]
        %v848 = vlaneseq
        %v849 = vshrl.u32 %v848, 7
        %v850 = vsub.s32 0, %v849
        %v851 = vrot.slane %v846, %v850
        %v852 = vlaneseq
        %v853 = vshrl.u32 %v852, 7
        %v854 = vsub.s32 1, %v853
        %v855 = vrot.slane %v846, %v854
        %v858 = vmul.f32 %v839, %v851
        %v859 = vmul.f32 %v842, %v855
        %v860 = vmul.f32 %v840, %v851
        %v861 = vmul.f32 %v843, %v855
        %v862 = vmul.f32 %v841, %v851
        %v863 = vmul.f32 %v844, %v855
        %864 = vset.pattern.permute.xlu0 7
        %865 = vperm.xlu0 %864, %v468
        %v866 = vpop.permute.xlu0 %865
        %868 = vset.pattern.permute.xlu0 7
        %869 = vperm.xlu0 %868, %v469
        %v870 = vpop.permute.xlu0 %869
        %872 = vset.pattern.permute.xlu0 7
        %873 = vperm.xlu0 %872, %v470
        %v874 = vpop.permute.xlu0 %873
        %v876 = vmul.f32 %v858, %v866
        %v877 = vmul.f32 %v859, %v866
        %v878 = vmul.f32 %v860, %v870
        %v879 = vmul.f32 %v861, %v870
        %v880 = vmul.f32 %v862, %v874
        %v881 = vmul.f32 %v863, %v874
        %v882 = vadd.f32 %v820, %v876
        %v883 = vadd.f32 %v821, %v877
        %v884 = vadd.f32 %v822, %v878
        %v885 = vadd.f32 %v823, %v879
        %v886 = vadd.f32 %v824, %v880
        %v887 = vadd.f32 %v825, %v881
        %888 = vrot.lane.b32.xlu0 %v423, 111
        %v889 = vpop.permute.xlu0 %888
        %890 = vrot.lane.b32.xlu0 %v425, 111
        %v891 = vpop.permute.xlu0 %890
        %892 = vrot.lane.b32.xlu0 %v427, 111
        %v893 = vpop.permute.xlu0 %892
        %894 = vrot.lane.b32.xlu0 %v424, 111
        %v895 = vpop.permute.xlu0 %894
        %896 = vrot.lane.b32.xlu0 %v426, 111
        %v897 = vpop.permute.xlu0 %896
        %898 = vrot.lane.b32.xlu0 %v428, 111
        %v899 = vpop.permute.xlu0 %898
        %vm900 = vcmp.lt.s32.totalorder %v442, 111
        %v901 = vsel %vm900, %v889, %v895
        %v902 = vsel %vm900, %v891, %v897
        %v903 = vsel %vm900, %v893, %v899
        %v904 = vsel %vm900, %v895, %v889
        %v905 = vsel %vm900, %v897, %v891
        %v906 = vsel %vm900, %v899, %v893
        %s907 = scalar_lea.vmem %s6, 16
        %v908 = vld [vmem:[%s907] ss:$8 sm:$0x3]
        %v910 = vlaneseq
        %v911 = vshrl.u32 %v910, 7
        %v912 = vsub.s32 0, %v911
        %v913 = vrot.slane %v908, %v912
        %v914 = vlaneseq
        %v915 = vshrl.u32 %v914, 7
        %v916 = vsub.s32 1, %v915
        %v917 = vrot.slane %v908, %v916
        %v920 = vmul.f32 %v901, %v913
        %v921 = vmul.f32 %v904, %v917
        %v922 = vmul.f32 %v902, %v913
        %v923 = vmul.f32 %v905, %v917
        %v924 = vmul.f32 %v903, %v913
        %v925 = vmul.f32 %v906, %v917
        %926 = vset.pattern.permute.xlu0 8
        %927 = vperm.xlu0 %926, %v468
        %v928 = vpop.permute.xlu0 %927
        %930 = vset.pattern.permute.xlu0 8
        %931 = vperm.xlu0 %930, %v469
        %v932 = vpop.permute.xlu0 %931
        %934 = vset.pattern.permute.xlu0 8
        %935 = vperm.xlu0 %934, %v470
        %v936 = vpop.permute.xlu0 %935
        %v938 = vmul.f32 %v920, %v928
        %v939 = vmul.f32 %v921, %v928
        %v940 = vmul.f32 %v922, %v932
        %v941 = vmul.f32 %v923, %v932
        %v942 = vmul.f32 %v924, %v936
        %v943 = vmul.f32 %v925, %v936
        %v944 = vadd.f32 %v882, %v938
        %v945 = vadd.f32 %v883, %v939
        %v946 = vadd.f32 %v884, %v940
        %v947 = vadd.f32 %v885, %v941
        %v948 = vadd.f32 %v886, %v942
        %v949 = vadd.f32 %v887, %v943
        %950 = vset.pattern.permute.xlu0 2
        %951 = vperm.xlu0 %950, %v381
        %v952 = vpop.permute.xlu0 %951
        %954 = vset.pattern.permute.xlu0 2
        %955 = vperm.xlu0 %954, %v382
        %v956 = vpop.permute.xlu0 %955
        %958 = vset.pattern.permute.xlu0 2
        %959 = vperm.xlu0 %958, %v383
        %v960 = vpop.permute.xlu0 %959
        %v962 = vmul.f32 %v944, %v952
        %v963 = vmul.f32 %v945, %v952
        %v964 = vmul.f32 %v946, %v956
        %v965 = vmul.f32 %v947, %v956
        %v966 = vmul.f32 %v948, %v960
        %v967 = vmul.f32 %v949, %v960
        %968 = vset.pattern.permute.xlu0 3
        %969 = vperm.xlu0 %968, %v381
        %v970 = vpop.permute.xlu0 %969
        %972 = vset.pattern.permute.xlu0 3
        %973 = vperm.xlu0 %972, %v382
        %v974 = vpop.permute.xlu0 %973
        %976 = vset.pattern.permute.xlu0 3
        %977 = vperm.xlu0 %976, %v383
        %v978 = vpop.permute.xlu0 %977
        %v980 = vadd.f32 %v962, %v970
        %v981 = vadd.f32 %v963, %v970
        %v982 = vadd.f32 %v964, %v974
        %v983 = vadd.f32 %v965, %v974
        %v984 = vadd.f32 %v966, %v978
        %v985 = vadd.f32 %v967, %v978
        %v986 = vmax.f32 %v980, 0.0
        %v987 = vmax.f32 %v981, 0.0
        %v988 = vmax.f32 %v982, 0.0
        %v989 = vmax.f32 %v983, 0.0
        %v990 = vmax.f32 %v984, 0.0
        %v991 = vmax.f32 %v985, 0.0
        %v992 = vld [vmem:[%s3] sm:$0xf]
        %vm993 = vcmask 195584
        %v995 = vsel %vm993, %v992, 0
        %997 = vmatprep.subr.mxu0 0.0
        %998 = vmatpush1.msra.mxu0 0.0
        %999 = vmatprep.subr.mxu0 0.0
        %1000 = vmatpush1.msra.mxu0 0.0
        %1001 = vmatprep.subr.mxu0 0.0
        %1002 = vmatpush1.msra.mxu0 0.0
        %1003 = vmatprep.subr.mxu0 0.0
        %1004 = vmatpush1.msra.mxu0 0.0
        %1005 = vmatprep.subr.mxu0 0.0
        %1006 = vmatpush1.msra.mxu0 0.0
        %1007 = vmatprep.subr.mxu0 0.0
        %1008 = vmatpush1.msra.mxu0 0.0
        %1009 = vmatprep.subr.mxu0 0.0
        %1010 = vmatpush1.msra.mxu0 0.0
        %1011 = vmatprep.subr.mxu0 0.0
        %1012 = vmatpush1.msra.mxu0 0.0
        %1013 = vmatprep.subr.mxu0 0.0
        %1014 = vmatpush1.msra.mxu0 0.0
        %1015 = vmatprep.subr.mxu0 0.0
        %1016 = vmatpush1.msra.mxu0 0.0
        %1017 = vmatprep.subr.mxu0 0.0
        %1018 = vmatpush1.msra.mxu0 0.0
        %1019 = vmatprep.subr.mxu0 0.0
        %1020 = vmatpush1.msra.mxu0 0.0
        %1021 = vmatprep.subr.mxu0 0.0
        %1022 = vmatpush1.msra.mxu0 0.0
        %1023 = vmatprep.subr.mxu0 %v991
        %1024 = vmatpush1.msra.mxu0 %v990
        %1025 = vmatprep.subr.mxu0 %v989
        %1026 = vmatpush1.msra.mxu0 %v988
        %1027 = vmatprep.subr.mxu0 %v987
        %1028 = vmatpush1.msra.mxu0 %v986
        %1029 = vmatprep.subr.mxu0 0.0
        %1030 = vmatpush2.msra.mxu0 0.0
        %1031 = vmatprep.subr.mxu0 0.0
        %1032 = vmatpush2.msra.mxu0 0.0
        %1033 = vmatprep.subr.mxu0 0.0
        %1034 = vmatpush2.msra.mxu0 0.0
        %1035 = vmatprep.subr.mxu0 0.0
        %1036 = vmatpush2.msra.mxu0 0.0
        %1037 = vmatprep.subr.mxu0 0.0
        %1038 = vmatpush2.msra.mxu0 0.0
        %1039 = vmatprep.subr.mxu0 0.0
        %1040 = vmatpush2.msra.mxu0 0.0
        %1041 = vmatprep.subr.mxu0 0.0
        %1042 = vmatpush2.msra.mxu0 0.0
        %1043 = vmatprep.subr.mxu0 0.0
        %1044 = vmatpush2.msra.mxu0 0.0
        %1045 = vmatprep.subr.mxu0 0.0
        %1046 = vmatpush2.msra.mxu0 0.0
        %1047 = vmatprep.subr.mxu0 0.0
        %1048 = vmatpush2.msra.mxu0 0.0
        %1049 = vmatprep.subr.mxu0 0.0
        %1050 = vmatpush2.msra.mxu0 0.0
        %1051 = vmatprep.subr.mxu0 0.0
        %1052 = vmatpush2.msra.mxu0 0.0
        %1053 = vmatprep.subr.mxu0 0.0
        %1054 = vmatpush2.msra.mxu0 0.0
        %1055 = vmatprep.subr.mxu0 0.0
        %1056 = vmatpush2.msra.mxu0 0.0
        %1057 = vmatprep.subr.mxu0 0.0
        %1058 = vmatpush2.msra.mxu0 0.0
        %1059 = vmatprep.subr.mxu0 0.0
        %1060 = vmatpush2.msra.mxu0 0.0
        %1061 = vmatprep.mubr.f32.mxu0 0.0
        %1062 = vmatmul.mubr.f32.gmra.mxu0 %v995
        %v1063 = vpop.f32.mrf.mxu0
        %v1064 = vadd.f32 0.0, %v1063
        %v1065 = vpop.f32.mrf.mxu0
        %v1066 = vadd.f32 0.0, %v1065
        %1067 = vdwg.mxu0
        %v1068 = vld [vmem:[%s5] sm:$0xf]
        %1070 = vset.pattern.permute.xlu0 0
        %1071 = vperm.xlu0 %1070, %v1068
        %v1072 = vpop.permute.xlu0 %1071
        %v1074 = vmul.f32 %v1064, %v1072
        %v1075 = vmul.f32 %v1066, %v1072
        %1076 = vset.pattern.permute.xlu0 1
        %1077 = vperm.xlu0 %1076, %v1068
        %v1078 = vpop.permute.xlu0 %1077
        %v1080 = vadd.f32 %v1074, %v1078
        %v1081 = vadd.f32 %v1075, %v1078
        %v1083 = vadd.f32 %v1080, %v277
        %v1084 = vadd.f32 %v1081, %v282
        %v1087 = vcombine.low %v1083, %v1084
        %1089 = vst [vmem:[%s271] sm:$0xff] %v1087
        %s1090 = sand.u32 %s181, 1
        %s1091 = scalar_lea.sflag [#allocation3], %s1090
        %s1092 = sand.u32 %s181, 1
        %s1093 = smul.addr %s1092, 8
        %s1094 = scalar_lea.vmem [#allocation2], %s1093
        // Predicated region
        $region49: #{tpu_custom_call.1} parent=47 // pred_check
          %p1095 = pneg %p191
        $region50: #{tpu_custom_call.1} parent=47 // pred_check_branch
          %1097 = sbr.rel (%p1095) target = $region52
        $region51: #{tpu_custom_call.1} parent=47 // pred_region
          %s1099 = ssub.s32 128, 128
          %1100 = vsyncadd %s1091, %s1099
          %s1101 = smul.addr %s21, 2
          %s1102 = smul.addr %s1101, 64
          %s1103 = scalar_lea.hbm %s7, %s1102
          %s1105 = sshll.u32 %s1094, 4
          %s1106 = int_to_ptr.vmem [resolvable:$true] %s1105
          %1108 = dma.vmem_to_hbm [thread:$0]  %s1106, 128, %s1103, %s1091
        $region52: #{tpu_custom_call.1} parent=47 // pred_fallthru
          _
      $region48: #{tpu_custom_call.1} parent=5 // pred_fallthru
        _
      %p1109 = scmp.le.s32.totalorder 2, %s16
      // Predicated region
      $region53: #{tpu_custom_call.1} parent=5 // pred_check
        %p1110 = pneg %p1109
      $region54: #{tpu_custom_call.1} parent=5 // pred_check_branch
        %1112 = sbr.rel (%p1110) target = $region56
      $region55: #{tpu_custom_call.1} parent=5 // pred_region
        %s1113 = ssub.s32 %s16, 2
        // Predicated region
        $region57: #{tpu_custom_call.1} parent=55 // pred_check
          %p1114 = pneg %p197
        $region58: #{tpu_custom_call.1} parent=55 // pred_check_branch
          %1116 = sbr.rel (%p1114) target = $region60
        $region59: #{tpu_custom_call.1} parent=55 // pred_region
          %s1117 = sand.u32 %s182, 1
          %s1118 = scalar_lea.sflag [#allocation3], %s1117
          %s1119 = sand.u32 %s182, 1
          %s1120 = smul.addr %s1119, 8
          %s1121 = scalar_lea.vmem [#allocation2], %s1120
          %1122 = dma.done %s1118, 128
        $region60: #{tpu_custom_call.1} parent=55 // pred_fallthru
          _
      $region56: #{tpu_custom_call.1} parent=5 // pred_fallthru
        _
    $region6: #{tpu_custom_call.1} parent=1 // loop_footer
      %s20 = sadd.s32 1, %s16
    $region7: #{tpu_custom_call.1} parent=1 // loop_footer_branch
      %15 = sbr.rel target = $region3
    $region8: #{tpu_custom_call.1} parent=1 // loop_exit
      _
    %1123 = vsyncpa [#allocation3], 1
    %s1124 = scalar_lea.sflag [#allocation3], 1
    %1125 = vsyncpa %s1124, 1

</llo_original>
